<compile_context>
chip_gen: v7x
topology: tpu7x:2x2x1
jax: 0.10.0
libtpu: 0.0.40
codegen_flags: <defaults>
</compile_context>

<pallas_src>
import math

import jax
import jax.numpy as jnp
from jax.experimental import pallas as pl
from jax.experimental.pallas import tpu as pltpu


# ---------------------------------------------------------------------------
# helpers
# ---------------------------------------------------------------------------

def _tile(n, max_tile, align):
    """Largest divisor of n that is <= max_tile and a multiple of `align`.
    Falls back to the full dimension (always accepted by Pallas)."""
    if n <= max_tile:
        return n
    t = (max_tile // align) * align
    while t >= align:
        if n % t == 0:
            return t
        t -= align
    return n


def _vmem_limit_bytes():
    """Chip-derived VMEM budget (review: don't hardcode 32 MiB)."""
    cap = 128 * 1024 * 1024
    try:
        cap = int(getattr(pltpu.get_tpu_info(), "vmem_capacity_bytes", cap))
    except Exception:
        pass
    # ~3/4 of physical, capped at 100 MiB: ~96 MiB on v5e/v6e, ~48 MiB on v7x.
    return max(32 * 1024 * 1024, min(cap * 3 // 4, 100 * 1024 * 1024))


# ---------------------------------------------------------------------------
# Kernel 1: fused per-head QKV projection + RoPE
# ---------------------------------------------------------------------------

def qkv_rope_kernel(x_ref, wq_ref, wk_ref, wv_ref, cos_ref, sin_ref,
                    q_ref, k_ref, v_ref):
    xb = x_ref[0]                        # (Ts, D) bf16
    cosf = cos_ref[...]                  # (Ts, hd) f32, scale folded
    sinf = sin_ref[...]                  # (Ts, hd) f32, [-sin | sin] * scale
    hd = wq_ref.shape[1]
    half = hd // 2

    # bf16 MXU matmuls, f32 accumulation.
    qh = jnp.dot(xb, wq_ref[...], preferred_element_type=jnp.float32)  # (Ts, hd)
    kh = jnp.dot(xb, wk_ref[...], preferred_element_type=jnp.float32)
    vh = jnp.dot(xb, wv_ref[...], preferred_element_type=jnp.float32)

    # Split-layout rotate_half: [re | im] -> [im | re]  (no pltpu.roll).
    def rot_half(t):
        return jnp.concatenate([t[:, half:], t[:, :half]], axis=-1)

    q_ref[0, 0] = (qh * cosf + rot_half(qh) * sinf).astype(q_ref.dtype)
    k_ref[0, 0] = (kh * cosf + rot_half(kh) * sinf).astype(k_ref.dtype)
    v_ref[0, 0] = vh.astype(v_ref.dtype)


# ---------------------------------------------------------------------------
# Kernel 2: causal flash attention (online softmax over k tiles)
# ---------------------------------------------------------------------------

def flash_attn_kernel(q_ref, k_ref, v_ref, o_ref, m_sc, l_sc, acc_sc):
    qi = pl.program_id(2)
    ki = pl.program_id(3)
    tq = q_ref.shape[2]
    tk = k_ref.shape[2]

    @pl.when(ki == 0)
    def _():
        m_sc[...] = jnp.full_like(m_sc, -jnp.inf)
        l_sc[...] = jnp.zeros_like(l_sc)
        acc_sc[...] = jnp.zeros_like(acc_sc)

    # Skip k tiles that lie entirely above the causal diagonal.
    @pl.when(ki * tk <= qi * tq + (tq - 1))
    def _():
        q = q_ref[0, 0]                  # (Tq, hd) bf16
        k = k_ref[0, 0]                  # (Tk, hd) bf16
        v = v_ref[0, 0]                  # (Tk, hd) bf16

        s = jax.lax.dot_general(q, k, (((1,), (1,)), ((), ())),
                                preferred_element_type=jnp.float32)  # (Tq, Tk)

        # Causal mask from (Tq,1)/(1,Tk) iotas broadcast inside the compare.
        row = qi * tq + jax.lax.broadcasted_iota(jnp.int32, (tq, 1), 0)
        col = ki * tk + jax.lax.broadcasted_iota(jnp.int32, (1, tk), 1)
        s = jnp.where(col <= row, s, -1e30)

        m_prev = m_sc[...]
        m_new = jnp.maximum(m_prev, jnp.max(s, axis=-1, keepdims=True))
        alpha = jnp.exp(m_prev - m_new)
        p = jnp.exp(s - m_new)
        l_sc[...] = alpha * l_sc[...] + jnp.sum(p, axis=-1, keepdims=True)
        acc_sc[...] = alpha * acc_sc[...] + jnp.dot(
            p.astype(v.dtype), v, preferred_element_type=jnp.float32)
        m_sc[...] = m_new

    @pl.when(ki == pl.num_programs(3) - 1)
    def _():
        o_ref[0] = (acc_sc[...] / l_sc[...]).astype(o_ref.dtype)


# ---------------------------------------------------------------------------
# Kernel 3: tiled matmul for the deferred Wo projection
# ---------------------------------------------------------------------------

def matmul_kernel(a_ref, b_ref, o_ref, acc_ref):
    @pl.when(pl.program_id(2) == 0)
    def _():
        acc_ref[...] = jnp.zeros_like(acc_ref)

    acc_ref[...] += jnp.dot(a_ref[...], b_ref[...],
                            preferred_element_type=jnp.float32)

    @pl.when(pl.program_id(2) == pl.num_programs(2) - 1)
    def _():
        o_ref[...] = acc_ref[...].astype(o_ref.dtype)


def _matmul(a, b, out_dtype, vmem_limit):
    M, K = a.shape
    _, N = b.shape
    tm = _tile(M, 256, 8)
    tn = _tile(N, 256, 128)
    tk = _tile(K, 512, 128)
    return pl.pallas_call(
        matmul_kernel,
        out_shape=jax.ShapeDtypeStruct((M, N), out_dtype),
        grid_spec=pltpu.PrefetchScalarGridSpec(
            num_scalar_prefetch=0,
            grid=(M // tm, N // tn, K // tk),
            in_specs=[
                pl.BlockSpec((tm, tk), lambda i, j, k: (i, k)),
                pl.BlockSpec((tk, tn), lambda i, j, k: (k, j)),
            ],
            out_specs=pl.BlockSpec((tm, tn), lambda i, j, k: (i, j)),
            scratch_shapes=[pltpu.VMEM((tm, tn), jnp.float32)],
        ),
        compiler_params=pltpu.CompilerParams(
            dimension_semantics=("parallel", "parallel", "arbitrary"),
            vmem_limit_bytes=vmem_limit,
        ),
    )(a, b)


# ---------------------------------------------------------------------------
# Wrapper
# ---------------------------------------------------------------------------

def attention_forward(x, wq, wk, wv, wo, cos, sin, *, n_heads):
    """x: (B, S, D); wq/wk/wv/wo: (D, D) torch layout (out, in); cos/sin: (S, head_dim/2)."""
    B, S, D = x.shape
    head_dim = D // n_heads
    half = head_dim // 2
    out_dtype = x.dtype
    assert head_dim % 128 == 0 or head_dim == D, "per-head column writes need head_dim % 128 == 0"

    # Per-head column permutation turning interleaved (re, im) pairs into
    # (re-block | im-block).  q.k is invariant to this within-head permutation,
    # and V / Wo keep the original order, so the math matches the reference.
    perm = []
    for h in range(n_heads):
        base = h * head_dim
        perm += [base + 2 * j for j in range(half)] + [base + 2 * j + 1 for j in range(half)]
    perm = jnp.asarray(perm, dtype=jnp.int32)

    # Pre-transpose to (in, out), permute Wq/Wk columns, cast weights + x to bf16.
    wq_t = wq.T[:, perm].astype(jnp.bfloat16)
    wk_t = wk.T[:, perm].astype(jnp.bfloat16)
    wv_t = wv.T.astype(jnp.bfloat16)
    wo_t = wo.T.astype(jnp.bfloat16)
    x_bf = x.astype(jnp.bfloat16)

    # Full-width cos/sin tables with the 1/sqrt(head_dim) score scale folded in
    # on both q and k:  (q*hd**-.25).(k*hd**-.25) == (q.k)/sqrt(hd).
    scale = float(head_dim) ** -0.25
    cos_f = (jnp.concatenate([cos, cos], axis=-1) * scale).astype(jnp.float32)   # (S, hd)
    sin_f = (jnp.concatenate([-sin, sin], axis=-1) * scale).astype(jnp.float32)  # (S, hd)

    vmem_limit = _vmem_limit_bytes()

    # ---- Kernel 1: per-head QKV projection + RoPE -> (B, H, S, hd) bf16 ----
    ts = _tile(S, 256, 8)
    qkv_shape = jax.ShapeDtypeStruct((B, n_heads, S, head_dim), jnp.bfloat16)
    q_rot, k_rot, v_h = pl.pallas_call(
        qkv_rope_kernel,
        out_shape=(qkv_shape, qkv_shape, qkv_shape),
        grid_spec=pltpu.PrefetchScalarGridSpec(
            num_scalar_prefetch=0,
            grid=(B, n_heads, S // ts),
            in_specs=[
                pl.BlockSpec((1, ts, D), lambda b, h, si: (b, si, 0)),        # x tile
                pl.BlockSpec((D, head_dim), lambda b, h, si: (0, h)),         # Wq^T head slice
                pl.BlockSpec((D, head_dim), lambda b, h, si: (0, h)),         # Wk^T head slice
                pl.BlockSpec((D, head_dim), lambda b, h, si: (0, h)),         # Wv^T head slice
                pl.BlockSpec((ts, head_dim), lambda b, h, si: (si, 0)),       # cos (scaled)
                pl.BlockSpec((ts, head_dim), lambda b, h, si: (si, 0)),       # sin (scaled, signed)
            ],
            out_specs=(
                pl.BlockSpec((1, 1, ts, head_dim), lambda b, h, si: (b, h, si, 0)),
                pl.BlockSpec((1, 1, ts, head_dim), lambda b, h, si: (b, h, si, 0)),
                pl.BlockSpec((1, 1, ts, head_dim), lambda b, h, si: (b, h, si, 0)),
            ),
        ),
        compiler_params=pltpu.CompilerParams(
            dimension_semantics=("parallel", "parallel", "parallel"),
            vmem_limit_bytes=vmem_limit,
        ),
    )(x_bf, wq_t, wk_t, wv_t, cos_f, sin_f)

    # ---- Kernel 2: causal flash attention -> attn (B, S, D) bf16 ----
    tq = _tile(S, 256, 8)
    tk = _tile(S, 256, 8)
    attn = pl.pallas_call(
        flash_attn_kernel,
        out_shape=jax.ShapeDtypeStruct((B, S, D), jnp.bfloat16),
        grid_spec=pltpu.PrefetchScalarGridSpec(
            num_scalar_prefetch=0,
            grid=(B, n_heads, S // tq, S // tk),
            in_specs=[
                pl.BlockSpec((1, 1, tq, head_dim), lambda b, h, qi, ki: (b, h, qi, 0)),
                pl.BlockSpec((1, 1, tk, head_dim), lambda b, h, qi, ki: (b, h, ki, 0)),
                pl.BlockSpec((1, 1, tk, head_dim), lambda b, h, qi, ki: (b, h, ki, 0)),
            ],
            out_specs=pl.BlockSpec((1, tq, head_dim), lambda b, h, qi, ki: (b, qi, h)),
            scratch_shapes=[
                pltpu.VMEM((tq, 1), jnp.float32),          # running max
                pltpu.VMEM((tq, 1), jnp.float32),          # running sum
                pltpu.VMEM((tq, head_dim), jnp.float32),   # output accumulator
            ],
        ),
        compiler_params=pltpu.CompilerParams(
            dimension_semantics=("parallel", "parallel", "parallel", "arbitrary"),
            vmem_limit_bytes=vmem_limit,
        ),
    )(q_rot, k_rot, v_h)

    # ---- Kernel 3: deferred output projection (single K=D matmul) ----
    out2d = _matmul(attn.reshape(B * S, D), wo_t, out_dtype, vmem_limit)
    return out2d.reshape(B, S, D)


# ---------------------------------------------------------------------------
# Pure-JAX reference (replicates the PyTorch forward, interleaved complex RoPE)
# ---------------------------------------------------------------------------

def reference(x, wq, wk, wv, wo, cos, sin, n_heads):
    B, S, D = x.shape
    hd = D // n_heads
    xq = (x @ wq.T).reshape(B, S, n_heads, hd)
    xk = (x @ wk.T).reshape(B, S, n_heads, hd)
    xv = (x @ wv.T).reshape(B, S, n_heads, hd)

    def rope(t):
        tr = t.reshape(B, S, n_heads, hd // 2, 2)
        re, im = tr[..., 0], tr[..., 1]
        c = cos[None, :, None, :]
        s = sin[None, :, None, :]
        return jnp.stack([re * c - im * s, re * s + im * c], axis=-1).reshape(B, S, n_heads, hd)

    q = rope(xq).transpose(0, 2, 1, 3)
    k = rope(xk).transpose(0, 2, 1, 3)
    v = xv.transpose(0, 2, 1, 3)
    scores = jnp.einsum('bhqd,bhkd->bhqk', q, k) / math.sqrt(hd)
    mask = jnp.where(jnp.arange(S)[None, :] > jnp.arange(S)[:, None], -jnp.inf, 0.0)
    scores = scores + mask
    p = jax.nn.softmax(scores.astype(jnp.float32), axis=-1).astype(q.dtype)
    o = jnp.einsum('bhqk,bhkd->bhqd', p, v).transpose(0, 2, 1, 3).reshape(B, S, D)
    return o @ wo.T


if __name__ == "__main__":
    # Small ModelArgs-consistent shapes: dim = n_heads * head_dim.
    B, S = 2, 8
    n_heads, head_dim = 2, 128
    D = n_heads * head_dim

    key = jax.random.PRNGKey(0)
    kx, kq, kk, kv, ko = jax.random.split(key, 5)
    bound = 1.0 / math.sqrt(D)
    x = jax.random.normal(kx, (B, S, D), jnp.float32)
    wq = jax.random.uniform(kq, (D, D), jnp.float32, -bound, bound)   # torch layout (out, in)
    wk = jax.random.uniform(kk, (D, D), jnp.float32, -bound, bound)
    wv = jax.random.uniform(kv, (D, D), jnp.float32, -bound, bound)
    wo = jax.random.uniform(ko, (D, D), jnp.float32, -bound, bound)

    # freqs_cis (LLaMA precompute, start_pos = 0), stored as cos/sin.
    start_pos = 0
    freqs = 1.0 / (10000.0 ** (jnp.arange(0, head_dim, 2, dtype=jnp.float32) / head_dim))
    t = jnp.arange(start_pos, start_pos + S, dtype=jnp.float32)
    angles = jnp.outer(t, freqs)                                      # (S, head_dim/2)
    cos, sin = jnp.cos(angles), jnp.sin(angles)

    out = attention_forward(x, wq, wk, wv, wo, cos, sin, n_heads=n_heads)
    out = jax.block_until_ready(out)

    ref = reference(x, wq, wk, wv, wo, cos, sin, n_heads)
    assert out.shape == (B, S, D) and out.dtype == x.dtype
    max_err = float(jnp.max(jnp.abs(out - ref)))
    # bf16 matmul operands (f32 accumulation) -> looser tolerance than pure f32.
    assert jnp.allclose(out, ref, atol=2e-2, rtol=2e-2), max_err
    print("KERNEL_OK")
</pallas_src>

<mosaic_0001>
module attributes {stable_mosaic.version = 11 : i64} {
  func.func @qkv_rope_kernel(%arg0: i32, %arg1: i32, %arg2: i32, %arg3: memref<1x8x256xbf16, #tpu.memory_space<vmem>>, %arg4: memref<256x128xbf16, #tpu.memory_space<vmem>>, %arg5: memref<256x128xbf16, #tpu.memory_space<vmem>>, %arg6: memref<256x128xbf16, #tpu.memory_space<vmem>>, %arg7: memref<8x128xf32, #tpu.memory_space<vmem>>, %arg8: memref<8x128xf32, #tpu.memory_space<vmem>>, %arg9: memref<1x1x8x128xbf16, #tpu.memory_space<vmem>>, %arg10: memref<1x1x8x128xbf16, #tpu.memory_space<vmem>>, %arg11: memref<1x1x8x128xbf16, #tpu.memory_space<vmem>>) attributes {dimension_semantics = [#tpu.dimension_semantics<parallel>, #tpu.dimension_semantics<parallel>, #tpu.dimension_semantics<parallel>], iteration_bounds = array<i64: 2, 2, 1>, scalar_prefetch = 0 : i64, scratch_operands = 0 : i64, tpu.core_type = #tpu.core_type<tc>, window_params = [{transform_indices = @transform_0, window_bounds = array<i64: 1, 8, 256>}, {transform_indices = @transform_1, window_bounds = array<i64: 256, 128>}, {transform_indices = @transform_2, window_bounds = array<i64: 256, 128>}, {transform_indices = @transform_3, window_bounds = array<i64: 256, 128>}, {transform_indices = @transform_4, window_bounds = array<i64: 8, 128>}, {transform_indices = @transform_5, window_bounds = array<i64: 8, 128>}, {transform_indices = @transform_6, window_bounds = array<i64: 1, 1, 8, 128>}, {transform_indices = @transform_7, window_bounds = array<i64: 1, 1, 8, 128>}, {transform_indices = @transform_8, window_bounds = array<i64: 1, 1, 8, 128>}]} {
    %c0 = arith.constant 0 : index
    %c0_0 = arith.constant 0 : index
    %c0_1 = arith.constant 0 : index
    %0 = vector.load %arg3[%c0, %c0_0, %c0_1] : memref<1x8x256xbf16, #tpu.memory_space<vmem>>, vector<1x8x256xbf16>
    %1 = vector.shape_cast %0 : vector<1x8x256xbf16> to vector<8x256xbf16>
    %c0_2 = arith.constant 0 : index
    %c0_3 = arith.constant 0 : index
    %2 = vector.load %arg7[%c0_2, %c0_3] : memref<8x128xf32, #tpu.memory_space<vmem>>, vector<8x128xf32>
    %c0_4 = arith.constant 0 : index
    %c0_5 = arith.constant 0 : index
    %3 = vector.load %arg8[%c0_4, %c0_5] : memref<8x128xf32, #tpu.memory_space<vmem>>, vector<8x128xf32>
    %c0_6 = arith.constant 0 : index
    %c0_7 = arith.constant 0 : index
    %4 = vector.load %arg4[%c0_6, %c0_7] : memref<256x128xbf16, #tpu.memory_space<vmem>>, vector<256x128xbf16>
    %cst = arith.constant dense<0.000000e+00> : vector<8x128xf32>
    %5 = tpu.matmul %1, %4, %cst {dimension_numbers = #tpu.dot_dimension_numbers<[1], [0], [0], [1], [0, 0, 1, 1], [], []>} : vector<8x256xbf16>, vector<256x128xbf16>, vector<8x128xf32> -> vector<8x128xf32>
    %c0_8 = arith.constant 0 : index
    %c0_9 = arith.constant 0 : index
    %6 = vector.load %arg5[%c0_8, %c0_9] : memref<256x128xbf16, #tpu.memory_space<vmem>>, vector<256x128xbf16>
    %cst_10 = arith.constant dense<0.000000e+00> : vector<8x128xf32>
    %7 = tpu.matmul %1, %6, %cst_10 {dimension_numbers = #tpu.dot_dimension_numbers<[1], [0], [0], [1], [0, 0, 1, 1], [], []>} : vector<8x256xbf16>, vector<256x128xbf16>, vector<8x128xf32> -> vector<8x128xf32>
    %c0_11 = arith.constant 0 : index
    %c0_12 = arith.constant 0 : index
    %8 = vector.load %arg6[%c0_11, %c0_12] : memref<256x128xbf16, #tpu.memory_space<vmem>>, vector<256x128xbf16>
    %cst_13 = arith.constant dense<0.000000e+00> : vector<8x128xf32>
    %9 = tpu.matmul %1, %8, %cst_13 {dimension_numbers = #tpu.dot_dimension_numbers<[1], [0], [0], [1], [0, 0, 1, 1], [], []>} : vector<8x256xbf16>, vector<256x128xbf16>, vector<8x128xf32> -> vector<8x128xf32>
    %10 = arith.mulf %5, %2 : vector<8x128xf32>
    %11 = vector.extract_strided_slice %5 {offsets = [0, 64], sizes = [8, 64], strides = [1, 1]} : vector<8x128xf32> to vector<8x64xf32>
    %12 = vector.extract_strided_slice %5 {offsets = [0, 0], sizes = [8, 64], strides = [1, 1]} : vector<8x128xf32> to vector<8x64xf32>
    %13 = tpu.concatenate %11, %12 in 1 : vector<8x64xf32>, vector<8x64xf32> -> vector<8x128xf32>
    %14 = arith.mulf %13, %3 : vector<8x128xf32>
    %15 = arith.addf %10, %14 : vector<8x128xf32>
    %16 = arith.truncf %15 : vector<8x128xf32> to vector<8x128xbf16>
    %c0_14 = arith.constant 0 : index
    %c0_15 = arith.constant 0 : index
    %c0_16 = arith.constant 0 : index
    %c0_17 = arith.constant 0 : index
    %17 = vector.load %arg9[%c0_14, %c0_15, %c0_16, %c0_17] : memref<1x1x8x128xbf16, #tpu.memory_space<vmem>>, vector<1x1x8x128xbf16>
    %18 = vector.shape_cast %17 : vector<1x1x8x128xbf16> to vector<8x128xbf16>
    %19 = vector.shape_cast %16 : vector<8x128xbf16> to vector<1x1x8x128xbf16>
    tpu.vector_store %arg9[%c0_14, %c0_15, %c0_16, %c0_17], %19 {strides = array<i32>} : memref<1x1x8x128xbf16, #tpu.memory_space<vmem>>, vector<1x1x8x128xbf16>,
    %20 = arith.mulf %7, %2 : vector<8x128xf32>
    %21 = vector.extract_strided_slice %7 {offsets = [0, 64], sizes = [8, 64], strides = [1, 1]} : vector<8x128xf32> to vector<8x64xf32>
    %22 = vector.extract_strided_slice %7 {offsets = [0, 0], sizes = [8, 64], strides = [1, 1]} : vector<8x128xf32> to vector<8x64xf32>
    %23 = tpu.concatenate %21, %22 in 1 : vector<8x64xf32>, vector<8x64xf32> -> vector<8x128xf32>
    %24 = arith.mulf %23, %3 : vector<8x128xf32>
    %25 = arith.addf %20, %24 : vector<8x128xf32>
    %26 = arith.truncf %25 : vector<8x128xf32> to vector<8x128xbf16>
    %c0_18 = arith.constant 0 : index
    %c0_19 = arith.constant 0 : index
    %c0_20 = arith.constant 0 : index
    %c0_21 = arith.constant 0 : index
    %27 = vector.load %arg10[%c0_18, %c0_19, %c0_20, %c0_21] : memref<1x1x8x128xbf16, #tpu.memory_space<vmem>>, vector<1x1x8x128xbf16>
    %28 = vector.shape_cast %27 : vector<1x1x8x128xbf16> to vector<8x128xbf16>
    %29 = vector.shape_cast %26 : vector<8x128xbf16> to vector<1x1x8x128xbf16>
    tpu.vector_store %arg10[%c0_18, %c0_19, %c0_20, %c0_21], %29 {strides = array<i32>} : memref<1x1x8x128xbf16, #tpu.memory_space<vmem>>, vector<1x1x8x128xbf16>,
    %30 = arith.truncf %9 : vector<8x128xf32> to vector<8x128xbf16>
    %c0_22 = arith.constant 0 : index
    %c0_23 = arith.constant 0 : index
    %c0_24 = arith.constant 0 : index
    %c0_25 = arith.constant 0 : index
    %31 = vector.load %arg11[%c0_22, %c0_23, %c0_24, %c0_25] : memref<1x1x8x128xbf16, #tpu.memory_space<vmem>>, vector<1x1x8x128xbf16>
    %32 = vector.shape_cast %31 : vector<1x1x8x128xbf16> to vector<8x128xbf16>
    %33 = vector.shape_cast %30 : vector<8x128xbf16> to vector<1x1x8x128xbf16>
    tpu.vector_store %arg11[%c0_22, %c0_23, %c0_24, %c0_25], %33 {strides = array<i32>} : memref<1x1x8x128xbf16, #tpu.memory_space<vmem>>, vector<1x1x8x128xbf16>,
    return
  }
  func.func @transform_0(%arg0: i32, %arg1: i32, %arg2: i32) -> (i32, i32, i32) {
    %c0_i32 = arith.constant 0 : i32
    %c0_i32_0 = arith.constant 0 : i32
    return %arg0, %arg2, %c0_i32 : i32, i32, i32
  }
  func.func @transform_1(%arg0: i32, %arg1: i32, %arg2: i32) -> (i32, i32) {
    %c0_i32 = arith.constant 0 : i32
    %c0_i32_0 = arith.constant 0 : i32
    return %c0_i32, %arg1 : i32, i32
  }
  func.func @transform_2(%arg0: i32, %arg1: i32, %arg2: i32) -> (i32, i32) {
    %c0_i32 = arith.constant 0 : i32
    %c0_i32_0 = arith.constant 0 : i32
    return %c0_i32, %arg1 : i32, i32
  }
  func.func @transform_3(%arg0: i32, %arg1: i32, %arg2: i32) -> (i32, i32) {
    %c0_i32 = arith.constant 0 : i32
    %c0_i32_0 = arith.constant 0 : i32
    return %c0_i32, %arg1 : i32, i32
  }
  func.func @transform_4(%arg0: i32, %arg1: i32, %arg2: i32) -> (i32, i32) {
    %c0_i32 = arith.constant 0 : i32
    %c0_i32_0 = arith.constant 0 : i32
    return %arg2, %c0_i32 : i32, i32
  }
  func.func @transform_5(%arg0: i32, %arg1: i32, %arg2: i32) -> (i32, i32) {
    %c0_i32 = arith.constant 0 : i32
    %c0_i32_0 = arith.constant 0 : i32
    return %arg2, %c0_i32 : i32, i32
  }
  func.func @transform_6(%arg0: i32, %arg1: i32, %arg2: i32) -> (i32, i32, i32, i32) {
    %c0_i32 = arith.constant 0 : i32
    %c0_i32_0 = arith.constant 0 : i32
    return %arg0, %arg1, %arg2, %c0_i32 : i32, i32, i32, i32
  }
  func.func @transform_7(%arg0: i32, %arg1: i32, %arg2: i32) -> (i32, i32, i32, i32) {
    %c0_i32 = arith.constant 0 : i32
    %c0_i32_0 = arith.constant 0 : i32
    return %arg0, %arg1, %arg2, %c0_i32 : i32, i32, i32, i32
  }
  func.func @transform_8(%arg0: i32, %arg1: i32, %arg2: i32) -> (i32, i32, i32, i32) {
    %c0_i32 = arith.constant 0 : i32
    %c0_i32_0 = arith.constant 0 : i32
    return %arg0, %arg1, %arg2, %c0_i32 : i32, i32, i32, i32
  }
}

</mosaic_0001>

<llo_original>
// kernel: tpu_custom_call.1
$region0: #{tpu_custom_call.1}
  #allocation0 [shape = 'u32[]', space=smem, size = 0x4, offset = 0x4, fixed_abs, tag = 'smem constant byte address 0x4 - core index']
  #allocation1 [shape = 'u32[144,128]{1,0:T(1,128)}', space=vmem, size = 0x12000, scoped, tag = 'internal scratch']
  %s0 = inlined_call_operand.hbm [shape: bf16[2,8,256], index: 0, kind: input, shape index: {}]
  %s1 = inlined_call_operand.hbm [shape: bf16[256,256], index: 1, kind: input, shape index: {}]
  %s2 = inlined_call_operand.hbm [shape: bf16[256,256], index: 2, kind: input, shape index: {}]
  %s3 = inlined_call_operand.hbm [shape: bf16[256,256], index: 3, kind: input, shape index: {}]
  %s4 = inlined_call_operand.hbm [shape: f32[8,128], index: 4, kind: input, shape index: {}]
  %s5 = inlined_call_operand.hbm [shape: f32[8,128], index: 5, kind: input, shape index: {}]
  %s6 = inlined_call_operand.hbm [shape: bf16[2,2,8,128], index: 6, kind: output, shape index: {0}]
  %s7 = inlined_call_operand.hbm [shape: bf16[2,2,8,128], index: 7, kind: output, shape index: {1}]
  %s8 = inlined_call_operand.hbm [shape: bf16[2,2,8,128], index: 8, kind: output, shape index: {2}]
  %9 = xla_tuple %s6, %s7, %s8
  %s10 = sld [smem:[#allocation0]]
  $region97: #{tpu_custom_call.1} parent=0
    _
  %s12 = ssub.s32 1, %s10
  %s13 = scalar_select 0, %s12, %s10
  $region1: #{tpu_custom_call.1} parent=0
    #allocation2 [shape = 'u8[8192]{0}', space=vmem, size = 0x2000, scoped, tag = 'input window, operand 0']
    #allocation3 [shape = 's32[2]{0}', space=sflag, size = 0x8, scoped, tag = 'scoped memory for tpu_custom_call.1']
    #allocation4 [shape = 's32[2]{0}', space=sflag, size = 0x8, scoped, tag = 'scoped memory for tpu_custom_call.1']
    #allocation5 [shape = 'u8[131072]{0}', space=vmem, size = 0x20000, scoped, tag = 'input window, operand 1']
    #allocation6 [shape = 's32[2]{0}', space=sflag, size = 0x8, scoped, tag = 'scoped memory for tpu_custom_call.1']
    #allocation7 [shape = 'u8[131072]{0}', space=vmem, size = 0x20000, scoped, tag = 'input window, operand 2']
    #allocation8 [shape = 'u8[131072]{0}', space=vmem, size = 0x20000, scoped, tag = 'input window, operand 3']
    #allocation9 [shape = 's32[2]{0}', space=sflag, size = 0x8, scoped, tag = 'scoped memory for tpu_custom_call.1']
    #allocation10 [shape = 'u8[4096]{0}', space=vmem, size = 0x1000, scoped, tag = 'input window, operand 4, single buffered']
    #allocation11 [shape = 'u8[4096]{0}', space=vmem, size = 0x1000, scoped, tag = 'input window, operand 5, single buffered']
    #allocation12 [shape = 's32[1]{0}', space=sflag, size = 0x4, scoped, tag = 'scoped memory for tpu_custom_call.1']
    #allocation13 [shape = 'u8[4096]{0}', space=vmem, size = 0x1000, scoped, tag = 'output window, operand 0']
    #allocation14 [shape = 'u8[4096]{0}', space=vmem, size = 0x1000, scoped, tag = 'output window, operand 1']
    #allocation15 [shape = 's32[2]{0}', space=sflag, size = 0x8, scoped, tag = 'scoped memory for tpu_custom_call.1']
    #allocation16 [shape = 'u8[4096]{0}', space=vmem, size = 0x1000, scoped, tag = 'output window, operand 2']
    %14 = vsyncpa [#allocation3], 0
    %s15 = scalar_lea.sflag [#allocation3], 1
    %16 = vsyncpa %s15, 0
    %17 = vsyncpa [#allocation6], 0
    %s18 = scalar_lea.sflag [#allocation6], 1
    %19 = vsyncpa %s18, 0
    %20 = vsyncpa [#allocation9], 0
    %s21 = scalar_lea.sflag [#allocation9], 1
    %22 = vsyncpa %s21, 0
    %23 = vsyncpa [#allocation12], 0
    %24 = vsyncpa [#allocation4], 0
    %s25 = scalar_lea.sflag [#allocation4], 1
    %26 = vsyncpa %s25, 0
    %27 = vsyncpa [#allocation15], 0
    %s28 = scalar_lea.sflag [#allocation15], 1
    %29 = vsyncpa %s28, 0
    loop: start=0, step=1, limit=6
    $region2: #{tpu_custom_call.1} parent=1 // loop_pre_header
      _
    $region3: #{tpu_custom_call.1} parent=1 // loop_header
      %s31 = sphi 0, %s35
      %p32 = scmp.ge.s32.totalorder %s31, 6
      %s38 = sphi 0, %s57
      %s39 = sphi 0, %s53
      %s40 = sphi 0, %s49
      %s41 = sphi 0, %s38
      %s42 = sphi 0, %s39
      %s43 = sphi 0, %s40
      %s44 = sphi 0, %s41
      %s45 = sphi 0, %s42
      %s46 = sphi 0, %s43
      %s62 = sphi 0, %s64
      %s65 = sphi 0, %s62
      %s66 = sphi 0, %s65
      %s82 = sphi 0, %s66
      %s88 = sphi 0, %s90
      %s91 = sphi 0, %s88
      %s92 = sphi 0, %s91
      %s108 = sphi 0, %s92
      %s114 = sphi 0, %s116
      %s117 = sphi 0, %s114
      %s118 = sphi 0, %s117
      %s134 = sphi 0, %s118
      %s140 = sphi 0, %s142
      %s143 = sphi 0, %s140
      %s144 = sphi 0, %s143
      %s160 = sphi 0, %s144
      %s166 = sphi 0, %s168
      %s169 = sphi 0, %s166
      %s170 = sphi 0, %s169
      %s186 = sphi 0, %s170
      %s192 = sphi 0, %s194
      %s195 = sphi 0, %s192
      %s196 = sphi 0, %s195
      %s212 = sphi 0, %s196
      %s222 = sphi 0, %s224
      %s225 = sphi 0, %s222
      %s226 = sphi 0, %s225
      %s242 = sphi 0, %s226
      %s252 = sphi 0, %s254
      %s255 = sphi 0, %s252
      %s256 = sphi 0, %s255
      %s272 = sphi 0, %s256
      %s282 = sphi 0, %s284
      %s285 = sphi 0, %s282
      %s286 = sphi 0, %s285
      %s302 = sphi 0, %s286
    $region4: #{tpu_custom_call.1} parent=1 // loop_header_branch
      %34 = sbr.rel (%p32) target = $region8
    $region5: #{tpu_custom_call.1} parent=1 // loop_body
      %s36 = ssub.s32 %s31, 1
      %s37 = ssub.s32 %s31, 2
      %s47 = sadd.s32 1, %s40
      %p48 = scmp.ge.s32.totalorder %s47, 1
      %s49 = scalar_select %p48, 0, %s47
      %s50 = sadd.s32 1, %s39
      %s51 = scalar_select %p48, %s50, %s39
      %p52 = scmp.ge.s32.totalorder %s51, 2
      %s53 = scalar_select %p52, 0, %s51
      %s54 = sadd.s32 1, %s38
      %s55 = scalar_select %p52, %s54, %s38
      %p56 = scmp.ge.s32.totalorder %s55, 2
      %s57 = scalar_select %p56, 0, %s55
      %s58 = ssub.s32 %s38, %s57
      %s59 = ssub.s32 %s40, %s49
      %s60 = sor.u32 %s58, %s59
      %p61 = scmp.eq.s32.totalorder %s60, 0
      %s63 = sadd.s32 %s62, 1
      %s64 = scalar_select %p61, %s62, %s63
      %p67 = pneg %p61
      %p68 = scmp.eq.s32.totalorder %s31, 3
      %p69 = por %p67, %p68
      %p70 = scmp.ne.s32.totalorder %s62, %s65
      %p71 = scmp.eq.s32.totalorder %s31, 0
      %p72 = por %p70, %p71
      %p73 = scmp.ne.s32.totalorder %s62, %s65
      %p74 = scmp.eq.s32.totalorder %s36, 3
      %p75 = por %p73, %p74
      %p76 = scmp.ne.s32.totalorder %s65, %s66
      %p77 = scmp.eq.s32.totalorder %s36, 0
      %p78 = por %p76, %p77
      %p79 = scmp.ne.s32.totalorder %s65, %s66
      %p80 = scmp.eq.s32.totalorder %s37, 3
      %p81 = por %p79, %p80
      %p83 = scmp.ne.s32.totalorder %s66, %s82
      %p84 = scmp.eq.s32.totalorder %s37, 0
      %p85 = por %p83, %p84
      %s86 = ssub.s32 %s39, %s53
      %p87 = scmp.eq.s32.totalorder %s86, 0
      %s89 = sadd.s32 %s88, 1
      %s90 = scalar_select %p87, %s88, %s89
      %p93 = pneg %p87
      %p94 = scmp.eq.s32.totalorder %s31, 3
      %p95 = por %p93, %p94
      %p96 = scmp.ne.s32.totalorder %s88, %s91
      %p97 = scmp.eq.s32.totalorder %s31, 0
      %p98 = por %p96, %p97
      %p99 = scmp.ne.s32.totalorder %s88, %s91
      %p100 = scmp.eq.s32.totalorder %s36, 3
      %p101 = por %p99, %p100
      %p102 = scmp.ne.s32.totalorder %s91, %s92
      %p103 = scmp.eq.s32.totalorder %s36, 0
      %p104 = por %p102, %p103
      %p105 = scmp.ne.s32.totalorder %s91, %s92
      %p106 = scmp.eq.s32.totalorder %s37, 3
      %p107 = por %p105, %p106
      %p109 = scmp.ne.s32.totalorder %s92, %s108
      %p110 = scmp.eq.s32.totalorder %s37, 0
      %p111 = por %p109, %p110
      %s112 = ssub.s32 %s39, %s53
      %p113 = scmp.eq.s32.totalorder %s112, 0
      %s115 = sadd.s32 %s114, 1
      %s116 = scalar_select %p113, %s114, %s115
      %p119 = pneg %p113
      %p120 = scmp.eq.s32.totalorder %s31, 3
      %p121 = por %p119, %p120
      %p122 = scmp.ne.s32.totalorder %s114, %s117
      %p123 = scmp.eq.s32.totalorder %s31, 0
      %p124 = por %p122, %p123
      %p125 = scmp.ne.s32.totalorder %s114, %s117
      %p126 = scmp.eq.s32.totalorder %s36, 3
      %p127 = por %p125, %p126
      %p128 = scmp.ne.s32.totalorder %s117, %s118
      %p129 = scmp.eq.s32.totalorder %s36, 0
      %p130 = por %p128, %p129
      %p131 = scmp.ne.s32.totalorder %s117, %s118
      %p132 = scmp.eq.s32.totalorder %s37, 3
      %p133 = por %p131, %p132
      %p135 = scmp.ne.s32.totalorder %s118, %s134
      %p136 = scmp.eq.s32.totalorder %s37, 0
      %p137 = por %p135, %p136
      %s138 = ssub.s32 %s39, %s53
      %p139 = scmp.eq.s32.totalorder %s138, 0
      %s141 = sadd.s32 %s140, 1
      %s142 = scalar_select %p139, %s140, %s141
      %p145 = pneg %p139
      %p146 = scmp.eq.s32.totalorder %s31, 3
      %p147 = por %p145, %p146
      %p148 = scmp.ne.s32.totalorder %s140, %s143
      %p149 = scmp.eq.s32.totalorder %s31, 0
      %p150 = por %p148, %p149
      %p151 = scmp.ne.s32.totalorder %s140, %s143
      %p152 = scmp.eq.s32.totalorder %s36, 3
      %p153 = por %p151, %p152
      %p154 = scmp.ne.s32.totalorder %s143, %s144
      %p155 = scmp.eq.s32.totalorder %s36, 0
      %p156 = por %p154, %p155
      %p157 = scmp.ne.s32.totalorder %s143, %s144
      %p158 = scmp.eq.s32.totalorder %s37, 3
      %p159 = por %p157, %p158
      %p161 = scmp.ne.s32.totalorder %s144, %s160
      %p162 = scmp.eq.s32.totalorder %s37, 0
      %p163 = por %p161, %p162
      %s164 = ssub.s32 %s40, %s49
      %p165 = scmp.eq.s32.totalorder %s164, 0
      %s167 = sadd.s32 %s166, 1
      %s168 = scalar_select %p165, %s166, %s167
      %p171 = pneg %p165
      %p172 = scmp.eq.s32.totalorder %s31, 3
      %p173 = por %p171, %p172
      %p174 = scmp.ne.s32.totalorder %s166, %s169
      %p175 = scmp.eq.s32.totalorder %s31, 0
      %p176 = por %p174, %p175
      %p177 = scmp.ne.s32.totalorder %s166, %s169
      %p178 = scmp.eq.s32.totalorder %s36, 3
      %p179 = por %p177, %p178
      %p180 = scmp.ne.s32.totalorder %s169, %s170
      %p181 = scmp.eq.s32.totalorder %s36, 0
      %p182 = por %p180, %p181
      %p183 = scmp.ne.s32.totalorder %s169, %s170
      %p184 = scmp.eq.s32.totalorder %s37, 3
      %p185 = por %p183, %p184
      %p187 = scmp.ne.s32.totalorder %s170, %s186
      %p188 = scmp.eq.s32.totalorder %s37, 0
      %p189 = por %p187, %p188
      %s190 = ssub.s32 %s40, %s49
      %p191 = scmp.eq.s32.totalorder %s190, 0
      %s193 = sadd.s32 %s192, 1
      %s194 = scalar_select %p191, %s192, %s193
      %p197 = pneg %p191
      %p198 = scmp.eq.s32.totalorder %s31, 3
      %p199 = por %p197, %p198
      %p200 = scmp.ne.s32.totalorder %s192, %s195
      %p201 = scmp.eq.s32.totalorder %s31, 0
      %p202 = por %p200, %p201
      %p203 = scmp.ne.s32.totalorder %s192, %s195
      %p204 = scmp.eq.s32.totalorder %s36, 3
      %p205 = por %p203, %p204
      %p206 = scmp.ne.s32.totalorder %s195, %s196
      %p207 = scmp.eq.s32.totalorder %s36, 0
      %p208 = por %p206, %p207
      %p209 = scmp.ne.s32.totalorder %s195, %s196
      %p210 = scmp.eq.s32.totalorder %s37, 3
      %p211 = por %p209, %p210
      %p213 = scmp.ne.s32.totalorder %s196, %s212
      %p214 = scmp.eq.s32.totalorder %s37, 0
      %p215 = por %p213, %p214
      %s216 = ssub.s32 %s38, %s57
      %s217 = ssub.s32 %s39, %s53
      %s218 = sor.u32 %s216, %s217
      %s219 = ssub.s32 %s40, %s49
      %s220 = sor.u32 %s218, %s219
      %p221 = scmp.eq.s32.totalorder %s220, 0
      %s223 = sadd.s32 %s222, 1
      %s224 = scalar_select %p221, %s222, %s223
      %p227 = pneg %p221
      %p228 = scmp.eq.s32.totalorder %s31, 3
      %p229 = por %p227, %p228
      %p230 = scmp.ne.s32.totalorder %s222, %s225
      %p231 = scmp.eq.s32.totalorder %s31, 0
      %p232 = por %p230, %p231
      %p233 = scmp.ne.s32.totalorder %s222, %s225
      %p234 = scmp.eq.s32.totalorder %s36, 3
      %p235 = por %p233, %p234
      %p236 = scmp.ne.s32.totalorder %s225, %s226
      %p237 = scmp.eq.s32.totalorder %s36, 0
      %p238 = por %p236, %p237
      %p239 = scmp.ne.s32.totalorder %s225, %s226
      %p240 = scmp.eq.s32.totalorder %s37, 3
      %p241 = por %p239, %p240
      %p243 = scmp.ne.s32.totalorder %s226, %s242
      %p244 = scmp.eq.s32.totalorder %s37, 0
      %p245 = por %p243, %p244
      %s246 = ssub.s32 %s38, %s57
      %s247 = ssub.s32 %s39, %s53
      %s248 = sor.u32 %s246, %s247
      %s249 = ssub.s32 %s40, %s49
      %s250 = sor.u32 %s248, %s249
      %p251 = scmp.eq.s32.totalorder %s250, 0
      %s253 = sadd.s32 %s252, 1
      %s254 = scalar_select %p251, %s252, %s253
      %p257 = pneg %p251
      %p258 = scmp.eq.s32.totalorder %s31, 3
      %p259 = por %p257, %p258
      %p260 = scmp.ne.s32.totalorder %s252, %s255
      %p261 = scmp.eq.s32.totalorder %s31, 0
      %p262 = por %p260, %p261
      %p263 = scmp.ne.s32.totalorder %s252, %s255
      %p264 = scmp.eq.s32.totalorder %s36, 3
      %p265 = por %p263, %p264
      %p266 = scmp.ne.s32.totalorder %s255, %s256
      %p267 = scmp.eq.s32.totalorder %s36, 0
      %p268 = por %p266, %p267
      %p269 = scmp.ne.s32.totalorder %s255, %s256
      %p270 = scmp.eq.s32.totalorder %s37, 3
      %p271 = por %p269, %p270
      %p273 = scmp.ne.s32.totalorder %s256, %s272
      %p274 = scmp.eq.s32.totalorder %s37, 0
      %p275 = por %p273, %p274
      %s276 = ssub.s32 %s38, %s57
      %s277 = ssub.s32 %s39, %s53
      %s278 = sor.u32 %s276, %s277
      %s279 = ssub.s32 %s40, %s49
      %s280 = sor.u32 %s278, %s279
      %p281 = scmp.eq.s32.totalorder %s280, 0
      %s283 = sadd.s32 %s282, 1
      %s284 = scalar_select %p281, %s282, %s283
      %p287 = pneg %p281
      %p288 = scmp.eq.s32.totalorder %s31, 3
      %p289 = por %p287, %p288
      %p290 = scmp.ne.s32.totalorder %s282, %s285
      %p291 = scmp.eq.s32.totalorder %s31, 0
      %p292 = por %p290, %p291
      %p293 = scmp.ne.s32.totalorder %s282, %s285
      %p294 = scmp.eq.s32.totalorder %s36, 3
      %p295 = por %p293, %p294
      %p296 = scmp.ne.s32.totalorder %s285, %s286
      %p297 = scmp.eq.s32.totalorder %s36, 0
      %p298 = por %p296, %p297
      %p299 = scmp.ne.s32.totalorder %s285, %s286
      %p300 = scmp.eq.s32.totalorder %s37, 3
      %p301 = por %p299, %p300
      %p303 = scmp.ne.s32.totalorder %s286, %s302
      %p304 = scmp.eq.s32.totalorder %s37, 0
      %p305 = por %p303, %p304
      %p306 = scmp.le.s32.totalorder 1, %s31
      %p307 = scmp.lt.s32.totalorder %s31, 5
      %p308 = pnand %p306, %p307
      %p309 = pneg %p308
      // Predicated region
      $region9: #{tpu_custom_call.1} parent=5 // pred_check
        _
      $region10: #{tpu_custom_call.1} parent=5 // pred_check_branch
        %311 = sbr.rel (%p308) target = $region12
      $region11: #{tpu_custom_call.1} parent=5 // pred_region
        %s312 = ssub.s32 %s31, 1
        // Predicated region
        $region13: #{tpu_custom_call.1} parent=11 // pred_check
          %p313 = pneg %p182
        $region14: #{tpu_custom_call.1} parent=11 // pred_check_branch
          %315 = sbr.rel (%p313) target = $region16
        $region15: #{tpu_custom_call.1} parent=11 // pred_region
          %s317 = ssub.s32 128, 128
          %318 = vsyncadd [#allocation9], %s317
          %s319 = smul.addr %s43, 128
          %s320 = scalar_lea.hbm %s4, %s319
          %s322 = sshll.u32 [#allocation10], 4
          %s323 = int_to_ptr.vmem [resolvable:$true] %s322
          %325 = dma.hbm_to_vmem [thread:$0]  %s320, 128, %s323, [#allocation9]
        $region16: #{tpu_custom_call.1} parent=11 // pred_fallthru
          _
        // Predicated region
        $region17: #{tpu_custom_call.1} parent=11 // pred_check
          %p326 = pneg %p208
        $region18: #{tpu_custom_call.1} parent=11 // pred_check_branch
          %328 = sbr.rel (%p326) target = $region20
        $region19: #{tpu_custom_call.1} parent=11 // pred_region
          %s330 = ssub.s32 128, 128
          %331 = vsyncadd [#allocation12], %s330
          %s332 = smul.addr %s43, 128
          %s333 = scalar_lea.hbm %s5, %s332
          %s335 = sshll.u32 [#allocation11], 4
          %s336 = int_to_ptr.vmem [resolvable:$true] %s335
          %338 = dma.hbm_to_vmem [thread:$0]  %s333, 128, %s336, [#allocation12]
        $region20: #{tpu_custom_call.1} parent=11 // pred_fallthru
          _
      $region12: #{tpu_custom_call.1} parent=5 // pred_fallthru
        _
      %p339 = scmp.lt.s32.totalorder %s31, 4
      // Predicated region
      $region21: #{tpu_custom_call.1} parent=5 // pred_check
        %p340 = pneg %p339
      $region22: #{tpu_custom_call.1} parent=5 // pred_check_branch
        %342 = sbr.rel (%p340) target = $region24
      $region23: #{tpu_custom_call.1} parent=5 // pred_region
        // Predicated region
        $region25: #{tpu_custom_call.1} parent=23 // pred_check
          %p343 = pneg %p72
        $region26: #{tpu_custom_call.1} parent=23 // pred_check_branch
          %345 = sbr.rel (%p343) target = $region28
        $region27: #{tpu_custom_call.1} parent=23 // pred_region
          %s346 = sand.u32 %s62, 1
          %s347 = scalar_lea.sflag [#allocation3], %s346
          %s348 = sand.u32 %s62, 1
          %s349 = smul.addr %s348, 8
          %s350 = scalar_lea.vmem [#allocation2], %s349
          %s352 = ssub.s32 128, 128
          %353 = vsyncadd %s347, %s352
          %s354 = smul.addr %s40, 2
          %s355 = smul.addr %s38, 2
          %s356 = sadd.s32 %s354, %s355
          %s357 = smul.addr %s356, 64
          %s358 = scalar_lea.hbm %s0, %s357
          %s360 = sshll.u32 %s350, 4
          %s361 = int_to_ptr.vmem [resolvable:$true] %s360
          %363 = dma.hbm_to_vmem [thread:$0]  %s358, 128, %s361, %s347
        $region28: #{tpu_custom_call.1} parent=23 // pred_fallthru
          _
        // Predicated region
        $region29: #{tpu_custom_call.1} parent=23 // pred_check
          %p364 = pneg %p98
        $region30: #{tpu_custom_call.1} parent=23 // pred_check_branch
          %366 = sbr.rel (%p364) target = $region32
        $region31: #{tpu_custom_call.1} parent=23 // pred_region
          %s367 = sand.u32 %s31, 1
          %s368 = scalar_lea.sflag [#allocation6], %s367
          %s369 = sand.u32 %s88, 1
          %s370 = smul.addr %s369, 128
          %s371 = scalar_lea.vmem [#allocation5], %s370
          %s373 = ssub.s32 2048, 2048
          %374 = vsyncadd %s368, %s373
          %s375 = smul.addr %s39, 64
          %s376 = scalar_lea.hbm %s1, %s375
          %s377 = sshll.u32 %s371, 4
          %s378 = int_to_ptr.vmem [resolvable:$true] %s377
          %383 = dma.hbm_to_vmem [thread:$0]  %s376, 2048, %s378, %s368, 128, 64, 4
        $region32: #{tpu_custom_call.1} parent=23 // pred_fallthru
          _
        // Predicated region
        $region33: #{tpu_custom_call.1} parent=23 // pred_check
          %p384 = pneg %p124
        $region34: #{tpu_custom_call.1} parent=23 // pred_check_branch
          %386 = sbr.rel (%p384) target = $region36
        $region35: #{tpu_custom_call.1} parent=23 // pred_region
          %s387 = sand.u32 %s31, 1
          %s388 = scalar_lea.sflag [#allocation6], %s387
          %s389 = sand.u32 %s114, 1
          %s390 = smul.addr %s389, 128
          %s391 = scalar_lea.vmem [#allocation7], %s390
          %s393 = ssub.s32 2048, 2048
          %394 = vsyncadd %s388, %s393
          %s395 = smul.addr %s39, 64
          %s396 = scalar_lea.hbm %s2, %s395
          %s397 = sshll.u32 %s391, 4
          %s398 = int_to_ptr.vmem [resolvable:$true] %s397
          %403 = dma.hbm_to_vmem [thread:$0]  %s396, 2048, %s398, %s388, 128, 64, 4
        $region36: #{tpu_custom_call.1} parent=23 // pred_fallthru
          _
        // Predicated region
        $region37: #{tpu_custom_call.1} parent=23 // pred_check
          %p404 = pneg %p150
        $region38: #{tpu_custom_call.1} parent=23 // pred_check_branch
          %406 = sbr.rel (%p404) target = $region40
        $region39: #{tpu_custom_call.1} parent=23 // pred_region
          %s407 = sand.u32 %s31, 1
          %s408 = scalar_lea.sflag [#allocation9], %s407
          %s409 = sand.u32 %s140, 1
          %s410 = smul.addr %s409, 128
          %s411 = scalar_lea.vmem [#allocation8], %s410
          %s413 = ssub.s32 2048, 2048
          %414 = vsyncadd %s408, %s413
          %s415 = smul.addr %s39, 64
          %s416 = scalar_lea.hbm %s3, %s415
          %s417 = sshll.u32 %s411, 4
          %s418 = int_to_ptr.vmem [resolvable:$true] %s417
          %423 = dma.hbm_to_vmem [thread:$0]  %s416, 2048, %s418, %s408, 128, 64, 4
        $region40: #{tpu_custom_call.1} parent=23 // pred_fallthru
          _
      $region24: #{tpu_custom_call.1} parent=5 // pred_fallthru
        _
      %p424 = scmp.le.s32.totalorder 1, %s31
      %p425 = scmp.lt.s32.totalorder %s31, 5
      %p426 = pnand %p424, %p425
      %p427 = pneg %p426
      // Predicated region
      $region41: #{tpu_custom_call.1} parent=5 // pred_check
        _
      $region42: #{tpu_custom_call.1} parent=5 // pred_check_branch
        %429 = sbr.rel (%p426) target = $region44
      $region43: #{tpu_custom_call.1} parent=5 // pred_region
        %s430 = ssub.s32 %s31, 1
        %s431 = sand.u32 %s65, 1
        %s432 = scalar_lea.sflag [#allocation3], %s431
        %s433 = sand.u32 %s65, 1
        %s434 = smul.addr %s433, 8
        %s435 = scalar_lea.vmem [#allocation2], %s434
        // Predicated region
        $region45: #{tpu_custom_call.1} parent=43 // pred_check
          %p436 = pneg %p78
        $region46: #{tpu_custom_call.1} parent=43 // pred_check_branch
          %438 = sbr.rel (%p436) target = $region48
        $region47: #{tpu_custom_call.1} parent=43 // pred_region
          %439 = dma.done %s432, 128
        $region48: #{tpu_custom_call.1} parent=43 // pred_fallthru
          _
        %s440 = sand.u32 %s36, 1
        %s441 = scalar_lea.sflag [#allocation6], %s440
        %s442 = sand.u32 %s91, 1
        %s443 = smul.addr %s442, 128
        %s444 = scalar_lea.vmem [#allocation5], %s443
        // Predicated region
        $region49: #{tpu_custom_call.1} parent=43 // pred_check
          %p445 = pneg %p104
        $region50: #{tpu_custom_call.1} parent=43 // pred_check_branch
          %447 = sbr.rel (%p445) target = $region52
        $region51: #{tpu_custom_call.1} parent=43 // pred_region
          %448 = dma.done %s441, 2048
        $region52: #{tpu_custom_call.1} parent=43 // pred_fallthru
          _
        %s449 = sand.u32 %s36, 1
        %s450 = scalar_lea.sflag [#allocation6], %s449
        %s451 = sand.u32 %s117, 1
        %s452 = smul.addr %s451, 128
        %s453 = scalar_lea.vmem [#allocation7], %s452
        // Predicated region
        $region53: #{tpu_custom_call.1} parent=43 // pred_check
          %p454 = pneg %p130
        $region54: #{tpu_custom_call.1} parent=43 // pred_check_branch
          %456 = sbr.rel (%p454) target = $region56
        $region55: #{tpu_custom_call.1} parent=43 // pred_region
          %457 = dma.done %s450, 2048
        $region56: #{tpu_custom_call.1} parent=43 // pred_fallthru
          _
        %s458 = sand.u32 %s36, 1
        %s459 = scalar_lea.sflag [#allocation9], %s458
        %s460 = sand.u32 %s143, 1
        %s461 = smul.addr %s460, 128
        %s462 = scalar_lea.vmem [#allocation8], %s461
        // Predicated region
        $region57: #{tpu_custom_call.1} parent=43 // pred_check
          %p463 = pneg %p156
        $region58: #{tpu_custom_call.1} parent=43 // pred_check_branch
          %465 = sbr.rel (%p463) target = $region60
        $region59: #{tpu_custom_call.1} parent=43 // pred_region
          %466 = dma.done %s459, 2048
        $region60: #{tpu_custom_call.1} parent=43 // pred_fallthru
          _
        // Predicated region
        $region61: #{tpu_custom_call.1} parent=43 // pred_check
          %p467 = pneg %p182
        $region62: #{tpu_custom_call.1} parent=43 // pred_check_branch
          %469 = sbr.rel (%p467) target = $region64
        $region63: #{tpu_custom_call.1} parent=43 // pred_region
          %470 = dma.done [#allocation9], 128
        $region64: #{tpu_custom_call.1} parent=43 // pred_fallthru
          _
        // Predicated region
        $region65: #{tpu_custom_call.1} parent=43 // pred_check
          %p471 = pneg %p208
        $region66: #{tpu_custom_call.1} parent=43 // pred_check_branch
          %473 = sbr.rel (%p471) target = $region68
        $region67: #{tpu_custom_call.1} parent=43 // pred_region
          %474 = dma.done [#allocation12], 128
        $region68: #{tpu_custom_call.1} parent=43 // pred_fallthru
          _
        %s475 = sand.u32 %s65, 1
        %s476 = scalar_lea.sflag [#allocation3], %s475
        %s477 = sand.u32 %s65, 1
        %s478 = smul.addr %s477, 8
        %s479 = scalar_lea.vmem [#allocation2], %s478
        %p480 = pneg %p78
        %p481 = pneg %p75
        %s482 = sand.u32 %s36, 1
        %s483 = scalar_lea.sflag [#allocation6], %s482
        %s484 = sand.u32 %s91, 1
        %s485 = smul.addr %s484, 128
        %s486 = scalar_lea.vmem [#allocation5], %s485
        %p487 = pneg %p104
        %p488 = pneg %p101
        %s489 = sand.u32 %s36, 1
        %s490 = scalar_lea.sflag [#allocation6], %s489
        %s491 = sand.u32 %s117, 1
        %s492 = smul.addr %s491, 128
        %s493 = scalar_lea.vmem [#allocation7], %s492
        %p494 = pneg %p130
        %p495 = pneg %p127
        %s496 = sand.u32 %s36, 1
        %s497 = scalar_lea.sflag [#allocation9], %s496
        %s498 = sand.u32 %s143, 1
        %s499 = smul.addr %s498, 128
        %s500 = scalar_lea.vmem [#allocation8], %s499
        %p501 = pneg %p156
        %p502 = pneg %p153
        %p503 = pneg %p182
        %p504 = pneg %p179
        %p505 = pneg %p208
        %p506 = pneg %p205
        %p507 = pneg %p238
        %p508 = pneg %p235
        %s509 = sand.u32 %s225, 1
        %s510 = scalar_lea.sflag [#allocation4], %s509
        %s511 = sand.u32 %s225, 1
        %s512 = smul.addr %s511, 4
        %s513 = scalar_lea.vmem [#allocation13], %s512
        %p514 = pneg %p268
        %p515 = pneg %p265
        %s516 = sand.u32 %s36, 1
        %s517 = scalar_lea.sflag [#allocation15], %s516
        %s518 = sand.u32 %s255, 1
        %s519 = smul.addr %s518, 4
        %s520 = scalar_lea.vmem [#allocation14], %s519
        %p521 = pneg %p298
        %p522 = pneg %p295
        %s523 = sand.u32 %s36, 1
        %s524 = scalar_lea.sflag [#allocation15], %s523
        %s525 = sand.u32 %s285, 1
        %s526 = smul.addr %s525, 4
        %s527 = scalar_lea.vmem [#allocation16], %s526
        %v529 = vld [vmem:[%s435] sm:$0xff]
        %v530 = vld [vmem:[#allocation10] sm:$0xff]
        %v531 = vld [vmem:[#allocation11] sm:$0xff]
        %v532 = vld [vmem:[%s444] sm:$0xf]
        %v533 = vld [vmem:[%s444 + $0x4] sm:$0xf]
        %v534 = vld [vmem:[%s444 + $0x8] sm:$0xf]
        %v535 = vld [vmem:[%s444 + $0xc] sm:$0xf]
        %v536 = vld [vmem:[%s444 + $0x10] sm:$0xf]
        %v537 = vld [vmem:[%s444 + $0x14] sm:$0xf]
        %v538 = vld [vmem:[%s444 + $0x18] sm:$0xf]
        %v539 = vld [vmem:[%s444 + $0x1c] sm:$0xf]
        %v540 = vld [vmem:[%s444 + $0x20] sm:$0xf]
        %v541 = vld [vmem:[%s444 + $0x24] sm:$0xf]
        %v542 = vld [vmem:[%s444 + $0x28] sm:$0xf]
        %v543 = vld [vmem:[%s444 + $0x2c] sm:$0xf]
        %v544 = vld [vmem:[%s444 + $0x30] sm:$0xf]
        %v545 = vld [vmem:[%s444 + $0x34] sm:$0xf]
        %v546 = vld [vmem:[%s444 + $0x38] sm:$0xf]
        %v547 = vld [vmem:[%s444 + $0x3c] sm:$0xf]
        %v548 = vld [vmem:[%s444 + $0x40] sm:$0xf]
        %v549 = vld [vmem:[%s444 + $0x44] sm:$0xf]
        %v550 = vld [vmem:[%s444 + $0x48] sm:$0xf]
        %v551 = vld [vmem:[%s444 + $0x4c] sm:$0xf]
        %v552 = vld [vmem:[%s444 + $0x50] sm:$0xf]
        %v553 = vld [vmem:[%s444 + $0x54] sm:$0xf]
        %v554 = vld [vmem:[%s444 + $0x58] sm:$0xf]
        %v555 = vld [vmem:[%s444 + $0x5c] sm:$0xf]
        %v556 = vld [vmem:[%s444 + $0x60] sm:$0xf]
        %v557 = vld [vmem:[%s444 + $0x64] sm:$0xf]
        %v558 = vld [vmem:[%s444 + $0x68] sm:$0xf]
        %v559 = vld [vmem:[%s444 + $0x6c] sm:$0xf]
        %v560 = vld [vmem:[%s444 + $0x70] sm:$0xf]
        %v561 = vld [vmem:[%s444 + $0x74] sm:$0xf]
        %v562 = vld [vmem:[%s444 + $0x78] sm:$0xf]
        %v563 = vld [vmem:[%s444 + $0x7c] sm:$0xf]
        %v565 = vunpack.c.l.b16 %v529
        %v566 = vunpack.c.h.b16 %v529
        %v567 = vpack.c.b16 %v565, %v565
        %v568 = vpack.c.b16 %v566, %v566
        %v603 = vunpack.c.l.b16 %v532
        %v604 = vunpack.c.l.b16 %v533
        %v605 = vunpack.c.l.b16 %v534
        %v606 = vunpack.c.l.b16 %v535
        %v607 = vunpack.c.l.b16 %v536
        %v608 = vunpack.c.l.b16 %v537
        %v609 = vunpack.c.l.b16 %v538
        %v610 = vunpack.c.l.b16 %v539
        %v611 = vunpack.c.l.b16 %v540
        %v612 = vunpack.c.l.b16 %v541
        %v613 = vunpack.c.l.b16 %v542
        %v614 = vunpack.c.l.b16 %v543
        %v615 = vunpack.c.l.b16 %v544
        %v616 = vunpack.c.l.b16 %v545
        %v617 = vunpack.c.l.b16 %v546
        %v618 = vunpack.c.l.b16 %v547
        %v619 = vunpack.c.l.b16 %v548
        %v620 = vunpack.c.l.b16 %v549
        %v621 = vunpack.c.l.b16 %v550
        %v622 = vunpack.c.l.b16 %v551
        %v623 = vunpack.c.l.b16 %v552
        %v624 = vunpack.c.l.b16 %v553
        %v625 = vunpack.c.l.b16 %v554
        %v626 = vunpack.c.l.b16 %v555
        %v627 = vunpack.c.l.b16 %v556
        %v628 = vunpack.c.l.b16 %v557
        %v629 = vunpack.c.l.b16 %v558
        %v630 = vunpack.c.l.b16 %v559
        %v631 = vunpack.c.l.b16 %v560
        %v632 = vunpack.c.l.b16 %v561
        %v633 = vunpack.c.l.b16 %v562
        %v634 = vunpack.c.l.b16 %v563
        %v635 = vpack.c.b16 %v604, %v603
        %v636 = vpack.c.b16 %v606, %v605
        %v637 = vpack.c.b16 %v608, %v607
        %v638 = vpack.c.b16 %v610, %v609
        %v639 = vpack.c.b16 %v612, %v611
        %v640 = vpack.c.b16 %v614, %v613
        %v641 = vpack.c.b16 %v616, %v615
        %v642 = vpack.c.b16 %v618, %v617
        %v643 = vpack.c.b16 %v620, %v619
        %v644 = vpack.c.b16 %v622, %v621
        %v645 = vpack.c.b16 %v624, %v623
        %v646 = vpack.c.b16 %v626, %v625
        %v647 = vpack.c.b16 %v628, %v627
        %v648 = vpack.c.b16 %v630, %v629
        %v649 = vpack.c.b16 %v632, %v631
        %v650 = vpack.c.b16 %v634, %v633
        %667 = vmatprep.subr.bf16.mxu0 0
        %668 = vmatpush1.bf16.msra.mxu0 %v635
        %669 = vmatprep.subr.bf16.mxu0 0
        %670 = vmatpush1.bf16.msra.mxu0 %v636
        %671 = vmatprep.subr.bf16.mxu0 0
        %672 = vmatpush1.bf16.msra.mxu0 %v637
        %673 = vmatprep.subr.bf16.mxu0 0
        %674 = vmatpush1.bf16.msra.mxu0 %v638
        %675 = vmatprep.subr.bf16.mxu0 0
        %676 = vmatpush1.bf16.msra.mxu0 %v639
        %677 = vmatprep.subr.bf16.mxu0 0
        %678 = vmatpush1.bf16.msra.mxu0 %v640
        %679 = vmatprep.subr.bf16.mxu0 0
        %680 = vmatpush1.bf16.msra.mxu0 %v641
        %681 = vmatprep.subr.bf16.mxu0 0
        %682 = vmatpush1.bf16.msra.mxu0 %v642
        %683 = vmatprep.subr.bf16.mxu0 0
        %684 = vmatpush1.bf16.msra.mxu0 %v643
        %685 = vmatprep.subr.bf16.mxu0 0
        %686 = vmatpush1.bf16.msra.mxu0 %v644
        %687 = vmatprep.subr.bf16.mxu0 0
        %688 = vmatpush1.bf16.msra.mxu0 %v645
        %689 = vmatprep.subr.bf16.mxu0 0
        %690 = vmatpush1.bf16.msra.mxu0 %v646
        %691 = vmatprep.subr.bf16.mxu0 0
        %692 = vmatpush1.bf16.msra.mxu0 %v647
        %693 = vmatprep.subr.bf16.mxu0 0
        %694 = vmatpush1.bf16.msra.mxu0 %v648
        %695 = vmatprep.subr.bf16.mxu0 0
        %696 = vmatpush1.bf16.msra.mxu0 %v649
        %697 = vmatprep.subr.bf16.mxu0 0
        %698 = vmatpush1.bf16.msra.mxu0 %v650
        %699 = vmatprep.mubr.bf16.mxu0 %v568
        %700 = vmatmul.mubr.bf16.gmra.mrb[0].mxu0 %v567
        %v701 = vpop.f32.mrb[0].mxu0
        %v702 = vadd.f32 0.0, %v701
        %v703 = vpop.f32.mrb[0].mxu0
        %v704 = vpop.f32.mrb[0].mxu0
        %v705 = vpop.f32.mrb[0].mxu0
        %706 = vdwg.mxu0
        %v707 = vld [vmem:[%s453] sm:$0xf]
        %v708 = vld [vmem:[%s453 + $0x4] sm:$0xf]
        %v709 = vld [vmem:[%s453 + $0x8] sm:$0xf]
        %v710 = vld [vmem:[%s453 + $0xc] sm:$0xf]
        %v711 = vld [vmem:[%s453 + $0x10] sm:$0xf]
        %v712 = vld [vmem:[%s453 + $0x14] sm:$0xf]
        %v713 = vld [vmem:[%s453 + $0x18] sm:$0xf]
        %v714 = vld [vmem:[%s453 + $0x1c] sm:$0xf]
        %v715 = vld [vmem:[%s453 + $0x20] sm:$0xf]
        %v716 = vld [vmem:[%s453 + $0x24] sm:$0xf]
        %v717 = vld [vmem:[%s453 + $0x28] sm:$0xf]
        %v718 = vld [vmem:[%s453 + $0x2c] sm:$0xf]
        %v719 = vld [vmem:[%s453 + $0x30] sm:$0xf]
        %v720 = vld [vmem:[%s453 + $0x34] sm:$0xf]
        %v721 = vld [vmem:[%s453 + $0x38] sm:$0xf]
        %v722 = vld [vmem:[%s453 + $0x3c] sm:$0xf]
        %v723 = vld [vmem:[%s453 + $0x40] sm:$0xf]
        %v724 = vld [vmem:[%s453 + $0x44] sm:$0xf]
        %v725 = vld [vmem:[%s453 + $0x48] sm:$0xf]
        %v726 = vld [vmem:[%s453 + $0x4c] sm:$0xf]
        %v727 = vld [vmem:[%s453 + $0x50] sm:$0xf]
        %v728 = vld [vmem:[%s453 + $0x54] sm:$0xf]
        %v729 = vld [vmem:[%s453 + $0x58] sm:$0xf]
        %v730 = vld [vmem:[%s453 + $0x5c] sm:$0xf]
        %v731 = vld [vmem:[%s453 + $0x60] sm:$0xf]
        %v732 = vld [vmem:[%s453 + $0x64] sm:$0xf]
        %v733 = vld [vmem:[%s453 + $0x68] sm:$0xf]
        %v734 = vld [vmem:[%s453 + $0x6c] sm:$0xf]
        %v735 = vld [vmem:[%s453 + $0x70] sm:$0xf]
        %v736 = vld [vmem:[%s453 + $0x74] sm:$0xf]
        %v737 = vld [vmem:[%s453 + $0x78] sm:$0xf]
        %v738 = vld [vmem:[%s453 + $0x7c] sm:$0xf]
        %v771 = vunpack.c.l.b16 %v707
        %v772 = vunpack.c.l.b16 %v708
        %v773 = vunpack.c.l.b16 %v709
        %v774 = vunpack.c.l.b16 %v710
        %v775 = vunpack.c.l.b16 %v711
        %v776 = vunpack.c.l.b16 %v712
        %v777 = vunpack.c.l.b16 %v713
        %v778 = vunpack.c.l.b16 %v714
        %v779 = vunpack.c.l.b16 %v715
        %v780 = vunpack.c.l.b16 %v716
        %v781 = vunpack.c.l.b16 %v717
        %v782 = vunpack.c.l.b16 %v718
        %v783 = vunpack.c.l.b16 %v719
        %v784 = vunpack.c.l.b16 %v720
        %v785 = vunpack.c.l.b16 %v721
        %v786 = vunpack.c.l.b16 %v722
        %v787 = vunpack.c.l.b16 %v723
        %v788 = vunpack.c.l.b16 %v724
        %v789 = vunpack.c.l.b16 %v725
        %v790 = vunpack.c.l.b16 %v726
        %v791 = vunpack.c.l.b16 %v727
        %v792 = vunpack.c.l.b16 %v728
        %v793 = vunpack.c.l.b16 %v729
        %v794 = vunpack.c.l.b16 %v730
        %v795 = vunpack.c.l.b16 %v731
        %v796 = vunpack.c.l.b16 %v732
        %v797 = vunpack.c.l.b16 %v733
        %v798 = vunpack.c.l.b16 %v734
        %v799 = vunpack.c.l.b16 %v735
        %v800 = vunpack.c.l.b16 %v736
        %v801 = vunpack.c.l.b16 %v737
        %v802 = vunpack.c.l.b16 %v738
        %v803 = vpack.c.b16 %v772, %v771
        %v804 = vpack.c.b16 %v774, %v773
        %v805 = vpack.c.b16 %v776, %v775
        %v806 = vpack.c.b16 %v778, %v777
        %v807 = vpack.c.b16 %v780, %v779
        %v808 = vpack.c.b16 %v782, %v781
        %v809 = vpack.c.b16 %v784, %v783
        %v810 = vpack.c.b16 %v786, %v785
        %v811 = vpack.c.b16 %v788, %v787
        %v812 = vpack.c.b16 %v790, %v789
        %v813 = vpack.c.b16 %v792, %v791
        %v814 = vpack.c.b16 %v794, %v793
        %v815 = vpack.c.b16 %v796, %v795
        %v816 = vpack.c.b16 %v798, %v797
        %v817 = vpack.c.b16 %v800, %v799
        %v818 = vpack.c.b16 %v802, %v801
        %835 = vmatprep.subr.bf16.mxu0 0
        %836 = vmatpush1.bf16.msra.mxu0 %v803
        %837 = vmatprep.subr.bf16.mxu0 0
        %838 = vmatpush1.bf16.msra.mxu0 %v804
        %839 = vmatprep.subr.bf16.mxu0 0
        %840 = vmatpush1.bf16.msra.mxu0 %v805
        %841 = vmatprep.subr.bf16.mxu0 0
        %842 = vmatpush1.bf16.msra.mxu0 %v806
        %843 = vmatprep.subr.bf16.mxu0 0
        %844 = vmatpush1.bf16.msra.mxu0 %v807
        %845 = vmatprep.subr.bf16.mxu0 0
        %846 = vmatpush1.bf16.msra.mxu0 %v808
        %847 = vmatprep.subr.bf16.mxu0 0
        %848 = vmatpush1.bf16.msra.mxu0 %v809
        %849 = vmatprep.subr.bf16.mxu0 0
        %850 = vmatpush1.bf16.msra.mxu0 %v810
        %851 = vmatprep.subr.bf16.mxu0 0
        %852 = vmatpush1.bf16.msra.mxu0 %v811
        %853 = vmatprep.subr.bf16.mxu0 0
        %854 = vmatpush1.bf16.msra.mxu0 %v812
        %855 = vmatprep.subr.bf16.mxu0 0
        %856 = vmatpush1.bf16.msra.mxu0 %v813
        %857 = vmatprep.subr.bf16.mxu0 0
        %858 = vmatpush1.bf16.msra.mxu0 %v814
        %859 = vmatprep.subr.bf16.mxu0 0
        %860 = vmatpush1.bf16.msra.mxu0 %v815
        %861 = vmatprep.subr.bf16.mxu0 0
        %862 = vmatpush1.bf16.msra.mxu0 %v816
        %863 = vmatprep.subr.bf16.mxu0 0
        %864 = vmatpush1.bf16.msra.mxu0 %v817
        %865 = vmatprep.subr.bf16.mxu0 0
        %866 = vmatpush1.bf16.msra.mxu0 %v818
        %867 = vmatprep.mubr.bf16.mxu0 %v568
        %868 = vmatmul.mubr.bf16.gmra.mrb[0].mxu0 %v567
        %v869 = vpop.f32.mrb[0].mxu0
        %v870 = vadd.f32 0.0, %v869
        %v871 = vpop.f32.mrb[0].mxu0
        %v872 = vpop.f32.mrb[0].mxu0
        %v873 = vpop.f32.mrb[0].mxu0
        %874 = vdwg.mxu0
        %v875 = vld [vmem:[%s462] sm:$0xf]
        %v876 = vld [vmem:[%s462 + $0x4] sm:$0xf]
        %v877 = vld [vmem:[%s462 + $0x8] sm:$0xf]
        %v878 = vld [vmem:[%s462 + $0xc] sm:$0xf]
        %v879 = vld [vmem:[%s462 + $0x10] sm:$0xf]
        %v880 = vld [vmem:[%s462 + $0x14] sm:$0xf]
        %v881 = vld [vmem:[%s462 + $0x18] sm:$0xf]
        %v882 = vld [vmem:[%s462 + $0x1c] sm:$0xf]
        %v883 = vld [vmem:[%s462 + $0x20] sm:$0xf]
        %v884 = vld [vmem:[%s462 + $0x24] sm:$0xf]
        %v885 = vld [vmem:[%s462 + $0x28] sm:$0xf]
        %v886 = vld [vmem:[%s462 + $0x2c] sm:$0xf]
        %v887 = vld [vmem:[%s462 + $0x30] sm:$0xf]
        %v888 = vld [vmem:[%s462 + $0x34] sm:$0xf]
        %v889 = vld [vmem:[%s462 + $0x38] sm:$0xf]
        %v890 = vld [vmem:[%s462 + $0x3c] sm:$0xf]
        %v891 = vld [vmem:[%s462 + $0x40] sm:$0xf]
        %v892 = vld [vmem:[%s462 + $0x44] sm:$0xf]
        %v893 = vld [vmem:[%s462 + $0x48] sm:$0xf]
        %v894 = vld [vmem:[%s462 + $0x4c] sm:$0xf]
        %v895 = vld [vmem:[%s462 + $0x50] sm:$0xf]
        %v896 = vld [vmem:[%s462 + $0x54] sm:$0xf]
        %v897 = vld [vmem:[%s462 + $0x58] sm:$0xf]
        %v898 = vld [vmem:[%s462 + $0x5c] sm:$0xf]
        %v899 = vld [vmem:[%s462 + $0x60] sm:$0xf]
        %v900 = vld [vmem:[%s462 + $0x64] sm:$0xf]
        %v901 = vld [vmem:[%s462 + $0x68] sm:$0xf]
        %v902 = vld [vmem:[%s462 + $0x6c] sm:$0xf]
        %v903 = vld [vmem:[%s462 + $0x70] sm:$0xf]
        %v904 = vld [vmem:[%s462 + $0x74] sm:$0xf]
        %v905 = vld [vmem:[%s462 + $0x78] sm:$0xf]
        %v906 = vld [vmem:[%s462 + $0x7c] sm:$0xf]
        %v939 = vunpack.c.l.b16 %v875
        %v940 = vunpack.c.l.b16 %v876
        %v941 = vunpack.c.l.b16 %v877
        %v942 = vunpack.c.l.b16 %v878
        %v943 = vunpack.c.l.b16 %v879
        %v944 = vunpack.c.l.b16 %v880
        %v945 = vunpack.c.l.b16 %v881
        %v946 = vunpack.c.l.b16 %v882
        %v947 = vunpack.c.l.b16 %v883
        %v948 = vunpack.c.l.b16 %v884
        %v949 = vunpack.c.l.b16 %v885
        %v950 = vunpack.c.l.b16 %v886
        %v951 = vunpack.c.l.b16 %v887
        %v952 = vunpack.c.l.b16 %v888
        %v953 = vunpack.c.l.b16 %v889
        %v954 = vunpack.c.l.b16 %v890
        %v955 = vunpack.c.l.b16 %v891
        %v956 = vunpack.c.l.b16 %v892
        %v957 = vunpack.c.l.b16 %v893
        %v958 = vunpack.c.l.b16 %v894
        %v959 = vunpack.c.l.b16 %v895
        %v960 = vunpack.c.l.b16 %v896
        %v961 = vunpack.c.l.b16 %v897
        %v962 = vunpack.c.l.b16 %v898
        %v963 = vunpack.c.l.b16 %v899
        %v964 = vunpack.c.l.b16 %v900
        %v965 = vunpack.c.l.b16 %v901
        %v966 = vunpack.c.l.b16 %v902
        %v967 = vunpack.c.l.b16 %v903
        %v968 = vunpack.c.l.b16 %v904
        %v969 = vunpack.c.l.b16 %v905
        %v970 = vunpack.c.l.b16 %v906
        %v971 = vpack.c.b16 %v940, %v939
        %v972 = vpack.c.b16 %v942, %v941
        %v973 = vpack.c.b16 %v944, %v943
        %v974 = vpack.c.b16 %v946, %v945
        %v975 = vpack.c.b16 %v948, %v947
        %v976 = vpack.c.b16 %v950, %v949
        %v977 = vpack.c.b16 %v952, %v951
        %v978 = vpack.c.b16 %v954, %v953
        %v979 = vpack.c.b16 %v956, %v955
        %v980 = vpack.c.b16 %v958, %v957
        %v981 = vpack.c.b16 %v960, %v959
        %v982 = vpack.c.b16 %v962, %v961
        %v983 = vpack.c.b16 %v964, %v963
        %v984 = vpack.c.b16 %v966, %v965
        %v985 = vpack.c.b16 %v968, %v967
        %v986 = vpack.c.b16 %v970, %v969
        %1003 = vmatprep.subr.bf16.mxu0 0
        %1004 = vmatpush1.bf16.msra.mxu0 %v971
        %1005 = vmatprep.subr.bf16.mxu0 0
        %1006 = vmatpush1.bf16.msra.mxu0 %v972
        %1007 = vmatprep.subr.bf16.mxu0 0
        %1008 = vmatpush1.bf16.msra.mxu0 %v973
        %1009 = vmatprep.subr.bf16.mxu0 0
        %1010 = vmatpush1.bf16.msra.mxu0 %v974
        %1011 = vmatprep.subr.bf16.mxu0 0
        %1012 = vmatpush1.bf16.msra.mxu0 %v975
        %1013 = vmatprep.subr.bf16.mxu0 0
        %1014 = vmatpush1.bf16.msra.mxu0 %v976
        %1015 = vmatprep.subr.bf16.mxu0 0
        %1016 = vmatpush1.bf16.msra.mxu0 %v977
        %1017 = vmatprep.subr.bf16.mxu0 0
        %1018 = vmatpush1.bf16.msra.mxu0 %v978
        %1019 = vmatprep.subr.bf16.mxu0 0
        %1020 = vmatpush1.bf16.msra.mxu0 %v979
        %1021 = vmatprep.subr.bf16.mxu0 0
        %1022 = vmatpush1.bf16.msra.mxu0 %v980
        %1023 = vmatprep.subr.bf16.mxu0 0
        %1024 = vmatpush1.bf16.msra.mxu0 %v981
        %1025 = vmatprep.subr.bf16.mxu0 0
        %1026 = vmatpush1.bf16.msra.mxu0 %v982
        %1027 = vmatprep.subr.bf16.mxu0 0
        %1028 = vmatpush1.bf16.msra.mxu0 %v983
        %1029 = vmatprep.subr.bf16.mxu0 0
        %1030 = vmatpush1.bf16.msra.mxu0 %v984
        %1031 = vmatprep.subr.bf16.mxu0 0
        %1032 = vmatpush1.bf16.msra.mxu0 %v985
        %1033 = vmatprep.subr.bf16.mxu0 0
        %1034 = vmatpush1.bf16.msra.mxu0 %v986
        %1035 = vmatprep.mubr.bf16.mxu0 %v568
        %1036 = vmatmul.mubr.bf16.gmra.mrb[0].mxu0 %v567
        %v1037 = vpop.f32.mrb[0].mxu0
        %v1038 = vadd.f32 0.0, %v1037
        %v1039 = vpop.f32.mrb[0].mxu0
        %v1040 = vpop.f32.mrb[0].mxu0
        %v1041 = vpop.f32.mrb[0].mxu0
        %1042 = vdwg.mxu0
        %v1043 = vmul.f32 %v702, %v530
        %1045 = vrot.lane.b32.xlu0 %v702, 64
        %v1046 = vpop.permute.xlu0 %1045
        %v1048 = vmul.f32 %v1046, %v531
        %v1049 = vadd.f32 %v1043, %v1048
        %v1050 = vpack.c.bf16 %v1049, %v1049
        %1051 = vst [vmem:[%s513] sm:$0xf] %v1050
        %v1052 = vmul.f32 %v870, %v530
        %1054 = vrot.lane.b32.xlu0 %v870, 64
        %v1055 = vpop.permute.xlu0 %1054
        %v1057 = vmul.f32 %v1055, %v531
        %v1058 = vadd.f32 %v1052, %v1057
        %v1059 = vpack.c.bf16 %v1058, %v1058
        %1060 = vst [vmem:[%s520] sm:$0xf] %v1059
        %v1061 = vpack.c.bf16 %v1038, %v1038
        %1062 = vst [vmem:[%s527] sm:$0xf] %v1061
        %s1063 = sand.u32 %s225, 1
        %s1064 = scalar_lea.sflag [#allocation4], %s1063
        %s1065 = sand.u32 %s225, 1
        %s1066 = smul.addr %s1065, 4
        %s1067 = scalar_lea.vmem [#allocation13], %s1066
        %s1068 = sand.u32 %s36, 1
        %s1069 = scalar_lea.sflag [#allocation15], %s1068
        %s1070 = sand.u32 %s255, 1
        %s1071 = smul.addr %s1070, 4
        %s1072 = scalar_lea.vmem [#allocation14], %s1071
        %s1073 = sand.u32 %s36, 1
        %s1074 = scalar_lea.sflag [#allocation15], %s1073
        %s1075 = sand.u32 %s285, 1
        %s1076 = smul.addr %s1075, 4
        %s1077 = scalar_lea.vmem [#allocation16], %s1076
        // Predicated region
        $region69: #{tpu_custom_call.1} parent=43 // pred_check
          %p1078 = pneg %p235
        $region70: #{tpu_custom_call.1} parent=43 // pred_check_branch
          %1080 = sbr.rel (%p1078) target = $region72
        $region71: #{tpu_custom_call.1} parent=43 // pred_region
          %s1082 = ssub.s32 64, 64
          %1083 = vsyncadd %s1064, %s1082
          %s1084 = sadd.s32 %s43, %s42
          %s1085 = smul.addr %s41, 2
          %s1086 = sadd.s32 %s1084, %s1085
          %s1087 = smul.addr %s1086, 64
          %s1088 = scalar_lea.hbm %s6, %s1087
          %s1090 = sshll.u32 %s1067, 4
          %s1091 = int_to_ptr.vmem [resolvable:$true] %s1090
          %1093 = dma.vmem_to_hbm [thread:$0]  %s1091, 64, %s1088, %s1064
        $region72: #{tpu_custom_call.1} parent=43 // pred_fallthru
          _
        // Predicated region
        $region73: #{tpu_custom_call.1} parent=43 // pred_check
          %p1094 = pneg %p265
        $region74: #{tpu_custom_call.1} parent=43 // pred_check_branch
          %1096 = sbr.rel (%p1094) target = $region76
        $region75: #{tpu_custom_call.1} parent=43 // pred_region
          %s1098 = ssub.s32 64, 64
          %1099 = vsyncadd %s1069, %s1098
          %s1100 = sadd.s32 %s43, %s42
          %s1101 = smul.addr %s41, 2
          %s1102 = sadd.s32 %s1100, %s1101
          %s1103 = smul.addr %s1102, 64
          %s1104 = scalar_lea.hbm %s7, %s1103
          %s1106 = sshll.u32 %s1072, 4
          %s1107 = int_to_ptr.vmem [resolvable:$true] %s1106
          %1109 = dma.vmem_to_hbm [thread:$0]  %s1107, 64, %s1104, %s1069
        $region76: #{tpu_custom_call.1} parent=43 // pred_fallthru
          _
        // Predicated region
        $region77: #{tpu_custom_call.1} parent=43 // pred_check
          %p1110 = pneg %p295
        $region78: #{tpu_custom_call.1} parent=43 // pred_check_branch
          %1112 = sbr.rel (%p1110) target = $region80
        $region79: #{tpu_custom_call.1} parent=43 // pred_region
          %s1114 = ssub.s32 64, 64
          %1115 = vsyncadd %s1074, %s1114
          %s1116 = sadd.s32 %s43, %s42
          %s1117 = smul.addr %s41, 2
          %s1118 = sadd.s32 %s1116, %s1117
          %s1119 = smul.addr %s1118, 64
          %s1120 = scalar_lea.hbm %s8, %s1119
          %s1122 = sshll.u32 %s1077, 4
          %s1123 = int_to_ptr.vmem [resolvable:$true] %s1122
          %1125 = dma.vmem_to_hbm [thread:$0]  %s1123, 64, %s1120, %s1074
        $region80: #{tpu_custom_call.1} parent=43 // pred_fallthru
          _
      $region44: #{tpu_custom_call.1} parent=5 // pred_fallthru
        _
      %p1126 = scmp.le.s32.totalorder 2, %s31
      // Predicated region
      $region81: #{tpu_custom_call.1} parent=5 // pred_check
        %p1127 = pneg %p1126
      $region82: #{tpu_custom_call.1} parent=5 // pred_check_branch
        %1129 = sbr.rel (%p1127) target = $region84
      $region83: #{tpu_custom_call.1} parent=5 // pred_region
        %s1130 = ssub.s32 %s31, 2
        // Predicated region
        $region85: #{tpu_custom_call.1} parent=83 // pred_check
          %p1131 = pneg %p241
        $region86: #{tpu_custom_call.1} parent=83 // pred_check_branch
          %1133 = sbr.rel (%p1131) target = $region88
        $region87: #{tpu_custom_call.1} parent=83 // pred_region
          %s1134 = sand.u32 %s226, 1
          %s1135 = scalar_lea.sflag [#allocation4], %s1134
          %s1136 = sand.u32 %s226, 1
          %s1137 = smul.addr %s1136, 4
          %s1138 = scalar_lea.vmem [#allocation13], %s1137
          %1139 = dma.done %s1135, 64
        $region88: #{tpu_custom_call.1} parent=83 // pred_fallthru
          _
        // Predicated region
        $region89: #{tpu_custom_call.1} parent=83 // pred_check
          %p1140 = pneg %p271
        $region90: #{tpu_custom_call.1} parent=83 // pred_check_branch
          %1142 = sbr.rel (%p1140) target = $region92
        $region91: #{tpu_custom_call.1} parent=83 // pred_region
          %s1143 = sand.u32 %s37, 1
          %s1144 = scalar_lea.sflag [#allocation15], %s1143
          %s1145 = sand.u32 %s256, 1
          %s1146 = smul.addr %s1145, 4
          %s1147 = scalar_lea.vmem [#allocation14], %s1146
          %1148 = dma.done %s1144, 64
        $region92: #{tpu_custom_call.1} parent=83 // pred_fallthru
          _
        // Predicated region
        $region93: #{tpu_custom_call.1} parent=83 // pred_check
          %p1149 = pneg %p301
        $region94: #{tpu_custom_call.1} parent=83 // pred_check_branch
          %1151 = sbr.rel (%p1149) target = $region96
        $region95: #{tpu_custom_call.1} parent=83 // pred_region
          %s1152 = sand.u32 %s37, 1
          %s1153 = scalar_lea.sflag [#allocation15], %s1152
          %s1154 = sand.u32 %s286, 1
          %s1155 = smul.addr %s1154, 4
          %s1156 = scalar_lea.vmem [#allocation16], %s1155
          %1157 = dma.done %s1153, 64
        $region96: #{tpu_custom_call.1} parent=83 // pred_fallthru
          _
      $region84: #{tpu_custom_call.1} parent=5 // pred_fallthru
        _
    $region6: #{tpu_custom_call.1} parent=1 // loop_footer
      %s35 = sadd.s32 1, %s31
    $region7: #{tpu_custom_call.1} parent=1 // loop_footer_branch
      %30 = sbr.rel target = $region3
    $region8: #{tpu_custom_call.1} parent=1 // loop_exit
      _
    %1158 = vsyncpa [#allocation3], 1
    %s1159 = scalar_lea.sflag [#allocation3], 1
    %1160 = vsyncpa %s1159, 1
    %1161 = vsyncpa [#allocation6], 1
    %s1162 = scalar_lea.sflag [#allocation6], 1
    %1163 = vsyncpa %s1162, 1
    %1164 = vsyncpa [#allocation9], 1
    %s1165 = scalar_lea.sflag [#allocation9], 1
    %1166 = vsyncpa %s1165, 1
    %1167 = vsyncpa [#allocation12], 1
    %1168 = vsyncpa [#allocation4], 1
    %s1169 = scalar_lea.sflag [#allocation4], 1
    %1170 = vsyncpa %s1169, 1
    %1171 = vsyncpa [#allocation15], 1
    %s1172 = scalar_lea.sflag [#allocation15], 1
    %1173 = vsyncpa %s1172, 1

</llo_original>
